<compile_context>
chip_gen: v7x
topology: tpu7x:2x2x1
jax: 0.10.0
libtpu: 0.0.40
codegen_flags: <defaults>
</compile_context>

<pallas_src>
import jax
import jax.numpy as jnp
from jax.experimental import pallas as pl
from jax.experimental.pallas import tpu as pltpu


def _zero_kernel(x_ref, o_ref):
    # Elementwise multiply by 0.0 — preserves dtype and IEEE NaN/Inf/-0.0 semantics
    # of torch.Tensor.mul(0.0). VPU slot has huge slack; this kernel is HBM-bound.
    o_ref[...] = x_ref[...] * jnp.asarray(0.0, dtype=x_ref.dtype)


def zero_forward(x):
    """Equivalent of Zero().forward(x) == x.mul(0.0)."""
    orig_shape = x.shape
    dtype = x.dtype

    # torch promotes integer/bool tensors multiplied by a python float to float.
    if not (jnp.issubdtype(dtype, jnp.floating) or jnp.issubdtype(dtype, jnp.complexfloating)):
        x = x.astype(jnp.float32)
        dtype = jnp.float32

    n = x.size
    if n == 0:
        return jnp.zeros(orig_shape, dtype)

    dtype_bytes = jnp.dtype(dtype).itemsize
    # dtype-aware sublane packing: 8 rows (f32), 16 (bf16/f16), 32 (int8/fp8)
    sub = 8 * max(1, 4 // dtype_bytes)

    # ---- choose a 2D view with NO padding / slicing --------------------------
    if n % 128 == 0:
        # lane-dense slab: cols a wide multiple of 128 -> unmasked full-width stores
        cols = 128
        while cols < 1024 and n % (cols * 2) == 0:
            cols *= 2
        rows = n // cols
    else:
        # ragged size: use the natural collapse; last block dim == full array dim is legal
        if len(orig_shape) >= 2:
            cols = orig_shape[-1]
        else:
            cols = n
        rows = n // cols
    x2d = x.reshape(rows, cols)

    # ---- choose the row tile (tm) ---------------------------------------------
    # 2 MiB tile * (2 in + 2 out double-buffers) = 8 MiB VMEM: safe on v5e/v6e/v7x defaults.
    max_tile_bytes = 2 * 1024 * 1024
    row_bytes = cols * dtype_bytes
    tm_cap = max(sub, (max_tile_bytes // max(row_bytes, 1)) // sub * sub)

    if rows <= sub:
        # single (partial-height) block; block dim == full array dim is legal
        tm = rows
    else:
        tm = min(tm_cap, (rows // sub) * sub)
        # v7x: make sure a non-trivial array produces >= 4 grid steps so the
        # "parallel" axis can shard across both TensorCores.
        if n * dtype_bytes > (1 << 20):
            want = -(-rows // 4)                       # ceil(rows / 4)
            want = max(sub, ((want + sub - 1) // sub) * sub)
            tm = max(sub, min(tm, want))

    grid_m = -(-rows // tm)                            # ceil; last block masked if partial

    out2d = pl.pallas_call(
        _zero_kernel,
        out_shape=jax.ShapeDtypeStruct((rows, cols), dtype),
        grid_spec=pl.GridSpec(
            grid=(grid_m,),
            in_specs=[pl.BlockSpec((tm, cols), lambda i: (i, 0))],
            out_specs=pl.BlockSpec((tm, cols), lambda i: (i, 0)),
        ),
        compiler_params=pltpu.CompilerParams(
            dimension_semantics=("parallel",),
        ),
        cost_estimate=pl.CostEstimate(
            flops=n, transcendentals=0, bytes_accessed=2 * n * dtype_bytes
        ),
    )(x2d)

    return out2d.reshape(orig_shape)


if __name__ == "__main__":
    key = jax.random.PRNGKey(0)

    # Primary test: small NCHW-style input (batch=2, channels=4, spatial=16x16).
    x = jax.random.normal(key, (2, 4, 16, 16), dtype=jnp.float32)
    # include a NaN to verify torch mul(0.0) special-value propagation
    x = x.at[0, 0, 0, 0].set(jnp.nan)
    y = jax.block_until_ready(zero_forward(x))
    assert y.shape == x.shape
    assert y.dtype == x.dtype
    assert bool(jnp.array_equal(y, x * 0.0, equal_nan=True))
    assert bool(jnp.isnan(y[0, 0, 0, 0]))

    # Secondary test: odd-sized (ragged) input — exercises the no-pad natural-collapse path.
    x2 = jax.random.normal(jax.random.PRNGKey(1), (3, 5, 7), dtype=jnp.float32)
    y2 = jax.block_until_ready(zero_forward(x2))
    assert y2.shape == x2.shape
    assert y2.dtype == x2.dtype
    assert bool(jnp.all(y2 == 0.0))

    # Tertiary test: bf16 input — exercises dtype-aware sublane alignment.
    x3 = jax.random.normal(jax.random.PRNGKey(2), (16, 256), dtype=jnp.bfloat16)
    y3 = jax.block_until_ready(zero_forward(x3))
    assert y3.shape == x3.shape
    assert y3.dtype == x3.dtype
    assert bool(jnp.all(y3 == 0))

    print("KERNEL_OK")
</pallas_src>

<mosaic_0001>
module attributes {stable_mosaic.version = 11 : i64} {
  func.func @_zero_kernel(%arg0: i32, %arg1: memref<2x1024xf32, #tpu.memory_space<vmem>>, %arg2: memref<2x1024xf32, #tpu.memory_space<vmem>>) attributes {dimension_semantics = [#tpu.dimension_semantics<parallel>], iteration_bounds = array<i64: 1>, scalar_prefetch = 0 : i64, scratch_operands = 0 : i64, tpu.core_type = #tpu.core_type<tc>, window_params = [{transform_indices = @transform_0, window_bounds = array<i64: 2, 1024>}, {transform_indices = @transform_1, window_bounds = array<i64: 2, 1024>}]} {
    %c0 = arith.constant 0 : index
    %c0_0 = arith.constant 0 : index
    %0 = vector.load %arg1[%c0, %c0_0] : memref<2x1024xf32, #tpu.memory_space<vmem>>, vector<2x1024xf32>
    %cst = arith.constant 0.000000e+00 : f32
    %1 = vector.broadcast %cst : f32 to vector<2x1024xf32>
    %2 = arith.mulf %0, %1 : vector<2x1024xf32>
    %c0_1 = arith.constant 0 : index
    %c0_2 = arith.constant 0 : index
    %3 = vector.load %arg2[%c0_1, %c0_2] : memref<2x1024xf32, #tpu.memory_space<vmem>>, vector<2x1024xf32>
    tpu.vector_store %arg2[%c0_1, %c0_2], %2 {strides = array<i32>} : memref<2x1024xf32, #tpu.memory_space<vmem>>, vector<2x1024xf32>,
    return
  }
  func.func @transform_0(%arg0: i32) -> (i32, i32) {
    %c0_i32 = arith.constant 0 : i32
    %c0_i32_0 = arith.constant 0 : i32
    return %arg0, %c0_i32 : i32, i32
  }
  func.func @transform_1(%arg0: i32) -> (i32, i32) {
    %c0_i32 = arith.constant 0 : i32
    %c0_i32_0 = arith.constant 0 : i32
    return %arg0, %c0_i32 : i32, i32
  }
}

</mosaic_0001>

<llo_original>
// kernel: tpu_custom_call.1
$region0: #{tpu_custom_call.1}
  #allocation0 [shape = 'u32[]', space=smem, size = 0x4, offset = 0x4, fixed_abs, tag = 'smem constant byte address 0x4 - core index']
  #allocation1 [shape = 'u32[144,128]{1,0:T(1,128)}', space=vmem, size = 0x12000, scoped, tag = 'internal scratch']
  %s0 = inlined_call_operand.hbm [shape: f32[2,1024], index: 0, kind: input, shape index: {}]
  %s1 = inlined_call_operand.hbm [shape: f32[2,1024], index: 1, kind: output, shape index: {}]
  %s2 = sld [smem:[#allocation0]]
  $region18: #{tpu_custom_call.1} parent=0
    _
  %s4 = ssub.s32 1, %s2
  %s5 = scalar_select 0, %s4, %s2
  $region1: #{tpu_custom_call.1} parent=0
    #allocation2 [shape = 'u8[8192]{0}', space=vmem, size = 0x2000, scoped, tag = 'input window, operand 0, single buffered']
    #allocation3 [shape = 's32[1]{0}', space=sflag, size = 0x4, scoped, tag = 'scoped memory for tpu_custom_call.1']
    #allocation4 [shape = 's32[1]{0}', space=sflag, size = 0x4, scoped, tag = 'scoped memory for tpu_custom_call.1']
    #allocation5 [shape = 'u8[8192]{0}', space=vmem, size = 0x2000, scoped, tag = 'output window, operand 0, single buffered']
    %6 = vsyncpa [#allocation3], 0
    %7 = vsyncpa [#allocation4], 0
    // Predicated region
    $region2: #{tpu_custom_call.1} parent=1 // pred_check
      _
    $region3: #{tpu_custom_call.1} parent=1 // pred_check_branch
      %9 = sbr.rel (0) target = $region5
    $region4: #{tpu_custom_call.1} parent=1 // pred_region
      %s11 = ssub.s32 256, 256
      %12 = vsyncadd [#allocation3], %s11
      %s14 = sshll.u32 [#allocation2], 4
      %s15 = int_to_ptr.vmem [resolvable:$true] %s14
      %17 = dma.hbm_to_vmem [thread:$0]  %s0, 256, %s15, [#allocation3]
    $region5: #{tpu_custom_call.1} parent=1 // pred_fallthru
      _
    // Predicated region
    $region6: #{tpu_custom_call.1} parent=1 // pred_check
      _
    $region7: #{tpu_custom_call.1} parent=1 // pred_check_branch
      %19 = sbr.rel (0) target = $region9
    $region8: #{tpu_custom_call.1} parent=1 // pred_region
      %20 = dma.done [#allocation3], 256
    $region9: #{tpu_custom_call.1} parent=1 // pred_fallthru
      _
    %v21 = vld [vmem:[#allocation2] sm:$0xff]
    %v22 = vld [vmem:[#allocation2 + $0x8] sm:$0xff]
    %v23 = vmul.f32 %v21, 0.0
    %v24 = vmul.f32 %v22, 0.0
    %25 = vst [vmem:[#allocation5] sm:$0xff] %v23
    %26 = vst [vmem:[#allocation5 + $0x8] sm:$0xff] %v24
    // Predicated region
    $region10: #{tpu_custom_call.1} parent=1 // pred_check
      _
    $region11: #{tpu_custom_call.1} parent=1 // pred_check_branch
      %28 = sbr.rel (0) target = $region13
    $region12: #{tpu_custom_call.1} parent=1 // pred_region
      %s30 = ssub.s32 256, 256
      %31 = vsyncadd [#allocation4], %s30
      %s33 = sshll.u32 [#allocation5], 4
      %s34 = int_to_ptr.vmem [resolvable:$true] %s33
      %36 = dma.vmem_to_hbm [thread:$0]  %s34, 256, %s1, [#allocation4]
    $region13: #{tpu_custom_call.1} parent=1 // pred_fallthru
      _
    // Predicated region
    $region14: #{tpu_custom_call.1} parent=1 // pred_check
      _
    $region15: #{tpu_custom_call.1} parent=1 // pred_check_branch
      %38 = sbr.rel (0) target = $region17
    $region16: #{tpu_custom_call.1} parent=1 // pred_region
      %39 = dma.done [#allocation4], 256
    $region17: #{tpu_custom_call.1} parent=1 // pred_fallthru
      _
    %40 = vsyncpa [#allocation3], 1
    %41 = vsyncpa [#allocation4], 1

</llo_original>
